<compile_context>
chip_gen: v7x
topology: tpu7x:2x2x1
jax: 0.10.0
libtpu: 0.0.40
codegen_flags: <defaults>
</compile_context>

<pallas_src>
import jax
import jax.numpy as jnp
from jax import lax
from jax.experimental import pallas as pl
from jax.experimental.pallas import tpu as pltpu


# ---------------------------------------------------------------------------
# Kernels
# ---------------------------------------------------------------------------
def _fast_kernel(x_ref, w_ref, b_ref, o_ref, act_ref):
    """Single-K-step path: o = (SiLU(x) @ W^T + b).  Grid = (M tiles, N tiles)."""
    j = pl.program_id(1)

    # Compute SiLU once per batch tile (first N tile), reuse from VMEM for j>0.
    @pl.when(j == 0)
    def _():
        xf = x_ref[...].astype(jnp.float32)          # sigmoid -> EUP, mul -> VPU
        act_ref[...] = (xf * jax.nn.sigmoid(xf)).astype(act_ref.dtype)

    # NT matmul: (tm, E) x (tn, E) contracting on the last dim of both -> (tm, tn).
    acc = lax.dot_general(
        act_ref[...], w_ref[...],
        dimension_numbers=(((1,), (1,)), ((), ())),
        preferred_element_type=jnp.float32)
    o_ref[...] = (acc + b_ref[...].astype(jnp.float32)).astype(o_ref.dtype)


def _general_kernel(x_ref, w_ref, b_ref, o_ref, acc_ref, act_ref):
    """Multi-K-step path with f32 VMEM accumulator.  Grid = (M, N, K tiles)."""
    j = pl.program_id(1)
    k = pl.program_id(2)

    # Initialize the accumulator with the (broadcast) bias -> no finalize add.
    @pl.when(k == 0)
    def _():
        acc_ref[...] = jnp.broadcast_to(
            b_ref[...].astype(jnp.float32), acc_ref.shape)

    # SiLU activation cache: filled once per (i, k) on the first N tile.
    @pl.when(j == 0)
    def _():
        xf = x_ref[...].astype(jnp.float32)
        act_ref[k] = (xf * jax.nn.sigmoid(xf)).astype(act_ref.dtype)

    acc_ref[...] += lax.dot_general(
        act_ref[k], w_ref[...],
        dimension_numbers=(((1,), (1,)), ((), ())),
        preferred_element_type=jnp.float32)

    @pl.when(k == pl.num_programs(2) - 1)
    def _():
        o_ref[...] = acc_ref[...].astype(o_ref.dtype)


# ---------------------------------------------------------------------------
# Wrapper
# ---------------------------------------------------------------------------
def _round_up(v, m):
    return ((v + m - 1) // m) * m


def _cdiv(a, b):
    return (a + b - 1) // b


def _select_tiles(B, E, O, in_dtype, out_dtype,
                  max_tm, max_tn, max_tk, vmem_budget):
    in_size = jnp.dtype(in_dtype).itemsize
    out_size = jnp.dtype(out_dtype).itemsize
    # Sublane packing: 8 for 32-bit, 16 for bf16, 32 for int8/fp8.
    pack = 8 * max(1, 4 // in_size)

    tm = min(max_tm, _round_up(B, pack))
    if B > tm:  # balance M tiles so the last one isn't mostly padding
        n_m = _cdiv(B, tm)
        tm = _round_up(_cdiv(B, n_m), pack)
    tk = min(max_tk, _round_up(E, 128))
    tn = min(max_tn, _round_up(O, 128))

    def est(tm_, tk_, tn_):
        Ep = _round_up(E, tk_)
        nk = Ep // tk_
        return (2 * (tm_ * tk_ + tn_ * tk_) * in_size   # x, W double-buffered
                + 2 * tm_ * tn_ * out_size              # output double-buffered
                + (tm_ * tn_ * 4 if nk > 1 else 0)      # f32 accumulator
                + tm_ * Ep * in_size                    # SiLU activation cache
                + 2 * 8 * tn_ * 4)                      # bias (padded sublanes)

    # Shrink the larger of tk/tn (128-granular) until we fit the VMEM budget.
    while est(tm, tk, tn) > vmem_budget and max(tk, tn) > 128:
        if tk >= tn and tk > 128:
            tk = max(128, (tk // 2 // 128) * 128)
        else:
            tn = max(128, (tn // 2 // 128) * 128)
    return tm, tk, tn


def embedding_model_forward(x, weight, bias, *,
                            max_tm=256, max_tn=1024, max_tk=1024,
                            vmem_budget=24 * 1024 * 1024):
    """x: (B, E), weight: (O, E) (nn.Linear layout), bias: (O,) -> (B, O)."""
    B, E = x.shape
    O = weight.shape[0]
    out_dtype = x.dtype

    tm, tk, tn = _select_tiles(B, E, O, x.dtype, out_dtype,
                               max_tm, max_tn, max_tk, vmem_budget)

    Bp = _round_up(B, tm)
    Ep = _round_up(E, tk)
    Op = _round_up(O, tn)

    # Zero padding is semantics-preserving: SiLU(0)=0, padded W rows/cols and
    # bias entries are 0, padded output rows/cols are sliced off below.
    if (Bp, Ep) != (B, E):
        x = jnp.pad(x, ((0, Bp - B), (0, Ep - E)))
    w = weight
    if (Op, Ep) != (O, E):
        w = jnp.pad(w, ((0, Op - O), (0, Ep - E)))
    b2 = bias.reshape(1, O)
    if Op != O:
        b2 = jnp.pad(b2, ((0, 0), (0, Op - O)))

    ni, nj, nk = Bp // tm, Op // tn, Ep // tk

    if nk == 1:
        # --- Fast path: single K step, no accumulator scratch. ---
        out = pl.pallas_call(
            _fast_kernel,
            out_shape=jax.ShapeDtypeStruct((Bp, Op), out_dtype),
            grid_spec=pltpu.PrefetchScalarGridSpec(
                num_scalar_prefetch=0,
                grid=(ni, nj),
                in_specs=[
                    pl.BlockSpec((tm, Ep), lambda i, j: (i, 0)),   # x
                    pl.BlockSpec((tn, Ep), lambda i, j: (j, 0)),   # W (O, E)
                    pl.BlockSpec((1, tn), lambda i, j: (0, j)),    # bias
                ],
                out_specs=pl.BlockSpec((tm, tn), lambda i, j: (i, j)),
                scratch_shapes=[pltpu.VMEM((tm, Ep), x.dtype)],    # SiLU cache
            ),
            compiler_params=pltpu.CompilerParams(
                # N axis must be "arbitrary": the SiLU cache is filled at j==0,
                # so every core has to see j==0 for each batch tile.
                dimension_semantics=("parallel", "arbitrary"),
                vmem_limit_bytes=40 * 1024 * 1024,
            ),
        )(x, w, b2)
    else:
        # --- General path: K reduction with f32 accumulator. ---
        out = pl.pallas_call(
            _general_kernel,
            out_shape=jax.ShapeDtypeStruct((Bp, Op), out_dtype),
            grid_spec=pltpu.PrefetchScalarGridSpec(
                num_scalar_prefetch=0,
                grid=(ni, nj, nk),
                in_specs=[
                    pl.BlockSpec((tm, tk), lambda i, j, k: (i, k)),   # x
                    pl.BlockSpec((tn, tk), lambda i, j, k: (j, k)),   # W (O, E)
                    pl.BlockSpec((1, tn), lambda i, j, k: (0, j)),    # bias
                ],
                out_specs=pl.BlockSpec((tm, tn), lambda i, j, k: (i, j)),
                scratch_shapes=[
                    pltpu.VMEM((tm, tn), jnp.float32),        # f32 accumulator
                    pltpu.VMEM((nk, tm, tk), x.dtype),        # SiLU cache
                ],
            ),
            compiler_params=pltpu.CompilerParams(
                dimension_semantics=("parallel", "arbitrary", "arbitrary"),
                vmem_limit_bytes=40 * 1024 * 1024,
            ),
        )(x, w, b2)

    return out[:B, :O]


def reference_forward(x, weight, bias):
    act = x * jax.nn.sigmoid(x)
    return act @ weight.T + bias


if __name__ == "__main__":
    key = jax.random.PRNGKey(0)
    k_x, k_w, k_b, k_x2, k_w2, k_b2 = jax.random.split(key, 6)

    # Shapes consistent with a UNet time-embedding head.
    batch = 8
    embedding_dimensions = 32
    out_channels = 64

    x = jax.random.normal(k_x, (batch, embedding_dimensions), dtype=jnp.float32)
    bound = 1.0 / (embedding_dimensions ** 0.5)
    weight = jax.random.uniform(
        k_w, (out_channels, embedding_dimensions), jnp.float32, -bound, bound)
    bias = jax.random.uniform(k_b, (out_channels,), jnp.float32, -bound, bound)

    y = embedding_model_forward(x, weight, bias)
    y = jax.block_until_ready(y)
    y_ref = reference_forward(x, weight, bias)
    assert y.shape == (batch, out_channels)
    assert jnp.allclose(y, y_ref, atol=1e-5, rtol=1e-5), "fast-path mismatch"

    # Also exercise the multi-K (general) path by capping tk.
    E2, O2 = 256, 64
    x2 = jax.random.normal(k_x2, (batch, E2), dtype=jnp.float32)
    bound2 = 1.0 / (E2 ** 0.5)
    w2 = jax.random.uniform(k_w2, (O2, E2), jnp.float32, -bound2, bound2)
    b2 = jax.random.uniform(k_b2, (O2,), jnp.float32, -bound2, bound2)
    y2 = jax.block_until_ready(embedding_model_forward(x2, w2, b2, max_tk=128))
    assert jnp.allclose(y2, reference_forward(x2, w2, b2),
                        atol=1e-5, rtol=1e-5), "general-path mismatch"

    print("KERNEL_OK")
</pallas_src>

<mosaic_0001>
module attributes {stable_mosaic.version = 11 : i64} {
  func.func @_fast_kernel(%arg0: i32, %arg1: i32, %arg2: memref<8x128xf32, #tpu.memory_space<vmem>>, %arg3: memref<128x128xf32, #tpu.memory_space<vmem>>, %arg4: memref<1x128xf32, #tpu.memory_space<vmem>>, %arg5: memref<8x128xf32, #tpu.memory_space<vmem>>, %arg6: memref<8x128xf32, #tpu.memory_space<vmem>>) attributes {dimension_semantics = [#tpu.dimension_semantics<parallel>, #tpu.dimension_semantics<arbitrary>], iteration_bounds = array<i64: 1, 1>, scalar_prefetch = 0 : i64, scratch_operands = 1 : i64, tpu.core_type = #tpu.core_type<tc>, window_params = [{transform_indices = @transform_0, window_bounds = array<i64: 8, 128>}, {transform_indices = @transform_1, window_bounds = array<i64: 128, 128>}, {transform_indices = @transform_2, window_bounds = array<i64: 1, 128>}, {transform_indices = @transform_3, window_bounds = array<i64: 8, 128>}]} {
    %c0_i32 = arith.constant 0 : i32
    %0 = arith.cmpi eq, %arg1, %c0_i32 : i32
    %1 = arith.extui %0 : i1 to i32
    %c0_i32_0 = arith.constant 0 : i32
    %2 = arith.cmpi ne, %1, %c0_i32_0 : i32
    scf.if %2 {
      %c0_8 = arith.constant 0 : index
      %c0_9 = arith.constant 0 : index
      %10 = vector.load %arg2[%c0_8, %c0_9] : memref<8x128xf32, #tpu.memory_space<vmem>>, vector<8x128xf32>
      %11 = arith.negf %10 : vector<8x128xf32>
      %12 = math.exp %11 : vector<8x128xf32>
      %cst_10 = arith.constant 1.000000e+00 : f32
      %13 = vector.broadcast %cst_10 : f32 to vector<8x128xf32>
      %14 = arith.addf %13, %12 : vector<8x128xf32>
      %15 = arith.divf %13, %14 : vector<8x128xf32>
      %16 = arith.mulf %10, %15 : vector<8x128xf32>
      %c0_11 = arith.constant 0 : index
      %c0_12 = arith.constant 0 : index
      %17 = vector.load %arg6[%c0_11, %c0_12] : memref<8x128xf32, #tpu.memory_space<vmem>>, vector<8x128xf32>
      tpu.vector_store %arg6[%c0_11, %c0_12], %16 {strides = array<i32>} : memref<8x128xf32, #tpu.memory_space<vmem>>, vector<8x128xf32>,
    } else {
    }
    %c0 = arith.constant 0 : index
    %c0_1 = arith.constant 0 : index
    %3 = vector.load %arg6[%c0, %c0_1] : memref<8x128xf32, #tpu.memory_space<vmem>>, vector<8x128xf32>
    %c0_2 = arith.constant 0 : index
    %c0_3 = arith.constant 0 : index
    %4 = vector.load %arg3[%c0_2, %c0_3] : memref<128x128xf32, #tpu.memory_space<vmem>>, vector<128x128xf32>
    %cst = arith.constant dense<0.000000e+00> : vector<8x128xf32>
    %5 = tpu.matmul %3, %4, %cst {dimension_numbers = #tpu.dot_dimension_numbers<[1], [1], [0], [0], [0, 0, 1, 0], [], []>} : vector<8x128xf32>, vector<128x128xf32>, vector<8x128xf32> -> vector<8x128xf32>
    %c0_4 = arith.constant 0 : index
    %c0_5 = arith.constant 0 : index
    %6 = vector.load %arg4[%c0_4, %c0_5] : memref<1x128xf32, #tpu.memory_space<vmem>>, vector<1x128xf32>
    %7 = vector.broadcast %6 : vector<1x128xf32> to vector<8x128xf32>
    %8 = arith.addf %5, %7 : vector<8x128xf32>
    %c0_6 = arith.constant 0 : index
    %c0_7 = arith.constant 0 : index
    %9 = vector.load %arg5[%c0_6, %c0_7] : memref<8x128xf32, #tpu.memory_space<vmem>>, vector<8x128xf32>
    tpu.vector_store %arg5[%c0_6, %c0_7], %8 {strides = array<i32>} : memref<8x128xf32, #tpu.memory_space<vmem>>, vector<8x128xf32>,
    return
  }
  func.func @transform_0(%arg0: i32, %arg1: i32) -> (i32, i32) {
    %c0_i32 = arith.constant 0 : i32
    %c0_i32_0 = arith.constant 0 : i32
    return %arg0, %c0_i32 : i32, i32
  }
  func.func @transform_1(%arg0: i32, %arg1: i32) -> (i32, i32) {
    %c0_i32 = arith.constant 0 : i32
    %c0_i32_0 = arith.constant 0 : i32
    return %arg1, %c0_i32 : i32, i32
  }
  func.func @transform_2(%arg0: i32, %arg1: i32) -> (i32, i32) {
    %c0_i32 = arith.constant 0 : i32
    %c0_i32_0 = arith.constant 0 : i32
    return %c0_i32, %arg1 : i32, i32
  }
  func.func @transform_3(%arg0: i32, %arg1: i32) -> (i32, i32) {
    %c0_i32 = arith.constant 0 : i32
    return %arg0, %arg1 : i32, i32
  }
}

</mosaic_0001>

<llo_original>
// kernel: tpu_custom_call.1
$region0: #{tpu_custom_call.1}
  #allocation0 [shape = 'u32[]', space=smem, size = 0x4, offset = 0x4, fixed_abs, tag = 'smem constant byte address 0x4 - core index']
  #allocation1 [shape = 'u32[144,128]{1,0:T(1,128)}', space=vmem, size = 0x12000, scoped, tag = 'internal scratch']
  #allocation2 [shape = 'f32[8,128]{1,0:T(8,128)}', space=vmem, size = 0x1000, scoped, tag = 'scratch operand']
  %s0 = inlined_call_operand.hbm [shape: f32[8,128], index: 0, kind: input, shape index: {}]
  %s1 = inlined_call_operand.hbm [shape: f32[128,128], index: 1, kind: input, shape index: {}]
  %s2 = inlined_call_operand.vmem [shape: f32[1,128], index: 2, kind: input, shape index: {}]
  %s3 = inlined_call_operand.hbm [shape: f32[8,128], index: 3, kind: output, shape index: {}]
  %s4 = sld [smem:[#allocation0]]
  $region34: #{tpu_custom_call.1} parent=0
    _
  %s6 = ssub.s32 1, %s4
  %s7 = scalar_select 0, %s6, %s4
  $region1: #{tpu_custom_call.1} parent=0
    #allocation3 [shape = 'u8[4096]{0}', space=vmem, size = 0x1000, scoped, tag = 'input window, operand 0, single buffered']
    #allocation4 [shape = 's32[1]{0}', space=sflag, size = 0x4, scoped, tag = 'scoped memory for tpu_custom_call.1']
    #allocation5 [shape = 's32[1]{0}', space=sflag, size = 0x4, scoped, tag = 'scoped memory for tpu_custom_call.1']
    #allocation6 [shape = 'u8[65536]{0}', space=vmem, size = 0x10000, scoped, tag = 'input window, operand 1, single buffered']
    #allocation7 [shape = 's32[1]{0}', space=sflag, size = 0x4, scoped, tag = 'scoped memory for tpu_custom_call.1']
    #allocation8 [shape = 'u8[4096]{0}', space=vmem, size = 0x1000, scoped, tag = 'output window, operand 0, single buffered']
    %8 = vsyncpa [#allocation4], 0
    %9 = vsyncpa [#allocation7], 0
    %10 = vsyncpa [#allocation5], 0
    // Predicated region
    $region2: #{tpu_custom_call.1} parent=1 // pred_check
      _
    $region3: #{tpu_custom_call.1} parent=1 // pred_check_branch
      %12 = sbr.rel (0) target = $region5
    $region4: #{tpu_custom_call.1} parent=1 // pred_region
      %s14 = ssub.s32 128, 128
      %15 = vsyncadd [#allocation4], %s14
      %s17 = sshll.u32 [#allocation3], 4
      %s18 = int_to_ptr.vmem [resolvable:$true] %s17
      %20 = dma.hbm_to_vmem [thread:$0]  %s0, 128, %s18, [#allocation4]
    $region5: #{tpu_custom_call.1} parent=1 // pred_fallthru
      _
    // Predicated region
    $region6: #{tpu_custom_call.1} parent=1 // pred_check
      _
    $region7: #{tpu_custom_call.1} parent=1 // pred_check_branch
      %22 = sbr.rel (0) target = $region9
    $region8: #{tpu_custom_call.1} parent=1 // pred_region
      %s24 = ssub.s32 2048, 2048
      %25 = vsyncadd [#allocation7], %s24
      %s26 = sshll.u32 [#allocation6], 4
      %s27 = int_to_ptr.vmem [resolvable:$true] %s26
      %32 = dma.hbm_to_vmem [thread:$0]  %s1, 2048, %s27, [#allocation7], 128, 128, 8
    $region9: #{tpu_custom_call.1} parent=1 // pred_fallthru
      _
    // Predicated region
    $region10: #{tpu_custom_call.1} parent=1 // pred_check
      _
    $region11: #{tpu_custom_call.1} parent=1 // pred_check_branch
      %34 = sbr.rel (0) target = $region13
    $region12: #{tpu_custom_call.1} parent=1 // pred_region
      _
    $region13: #{tpu_custom_call.1} parent=1 // pred_fallthru
      _
    // Predicated region
    $region14: #{tpu_custom_call.1} parent=1 // pred_check
      _
    $region15: #{tpu_custom_call.1} parent=1 // pred_check_branch
      %36 = sbr.rel (0) target = $region17
    $region16: #{tpu_custom_call.1} parent=1 // pred_region
      %37 = dma.done [#allocation4], 128
    $region17: #{tpu_custom_call.1} parent=1 // pred_fallthru
      _
    // Predicated region
    $region18: #{tpu_custom_call.1} parent=1 // pred_check
      _
    $region19: #{tpu_custom_call.1} parent=1 // pred_check_branch
      %39 = sbr.rel (0) target = $region21
    $region20: #{tpu_custom_call.1} parent=1 // pred_region
      %40 = dma.done [#allocation7], 2048
    $region21: #{tpu_custom_call.1} parent=1 // pred_fallthru
      _
    %p41 = scmp.eq.s32.totalorder 0, 0
    // Predicated region
    $region22: #{tpu_custom_call.1} parent=1 // pred_check
      %p42 = pneg %p41
    $region23: #{tpu_custom_call.1} parent=1 // pred_check_branch
      %44 = sbr.rel (%p42) target = $region25
    $region24: #{tpu_custom_call.1} parent=1 // pred_region
      %v45 = vld [vmem:[#allocation3] sm:$0xff]
      %v46 = vxor.u32 %v45, 2147483648
      %v47 = vmul.f32 %v46, 1.442695
      %v48 = vpow.pop %v47
      %v49 = vadd.f32 %v48, 1.0
      %v50 = vrcp.pop %v49
      %v51 = vmul.f32 1.0, %v50
      %v52 = vmul.f32 %v45, %v51
      %53 = vst [vmem:[#allocation2] sm:$0xff] %v52
    $region25: #{tpu_custom_call.1} parent=1 // pred_fallthru
      _
    %v54 = vld [vmem:[#allocation2] sm:$0xff]
    %v55 = vld [vmem:[#allocation6] sm:$0xff]
    %v56 = vld [vmem:[#allocation6 + $0x8] sm:$0xff]
    %v57 = vld [vmem:[#allocation6 + $0x10] sm:$0xff]
    %v58 = vld [vmem:[#allocation6 + $0x18] sm:$0xff]
    %v59 = vld [vmem:[#allocation6 + $0x20] sm:$0xff]
    %v60 = vld [vmem:[#allocation6 + $0x28] sm:$0xff]
    %v61 = vld [vmem:[#allocation6 + $0x30] sm:$0xff]
    %v62 = vld [vmem:[#allocation6 + $0x38] sm:$0xff]
    %v63 = vld [vmem:[#allocation6 + $0x40] sm:$0xff]
    %v64 = vld [vmem:[#allocation6 + $0x48] sm:$0xff]
    %v65 = vld [vmem:[#allocation6 + $0x50] sm:$0xff]
    %v66 = vld [vmem:[#allocation6 + $0x58] sm:$0xff]
    %v67 = vld [vmem:[#allocation6 + $0x60] sm:$0xff]
    %v68 = vld [vmem:[#allocation6 + $0x68] sm:$0xff]
    %v69 = vld [vmem:[#allocation6 + $0x70] sm:$0xff]
    %v70 = vld [vmem:[#allocation6 + $0x78] sm:$0xff]
    %v71 = vld [vmem:[%s2] sm:$0x1]
    %v73 = vlaneseq
    %v74 = vshrl.u32 %v73, 7
    %v75 = vsub.s32 0, %v74
    %v76 = vrot.slane %v71, %v75
    %78 = vmatprep.subr.mxu0 0.0
    %79 = vmatpush1.xpose.msra.mxu0 %v55
    %80 = vmatprep.subr.mxu0 0.0
    %81 = vmatpush1.xpose.msra.mxu0 %v56
    %82 = vmatprep.subr.mxu0 0.0
    %83 = vmatpush1.xpose.msra.mxu0 %v57
    %84 = vmatprep.subr.mxu0 0.0
    %85 = vmatpush1.xpose.msra.mxu0 %v58
    %86 = vmatprep.subr.mxu0 0.0
    %87 = vmatpush1.xpose.msra.mxu0 %v59
    %88 = vmatprep.subr.mxu0 0.0
    %89 = vmatpush1.xpose.msra.mxu0 %v60
    %90 = vmatprep.subr.mxu0 0.0
    %91 = vmatpush1.xpose.msra.mxu0 %v61
    %92 = vmatprep.subr.mxu0 0.0
    %93 = vmatpush1.xpose.msra.mxu0 %v62
    %94 = vmatprep.subr.mxu0 0.0
    %95 = vmatpush1.xpose.msra.mxu0 %v63
    %96 = vmatprep.subr.mxu0 0.0
    %97 = vmatpush1.xpose.msra.mxu0 %v64
    %98 = vmatprep.subr.mxu0 0.0
    %99 = vmatpush1.xpose.msra.mxu0 %v65
    %100 = vmatprep.subr.mxu0 0.0
    %101 = vmatpush1.xpose.msra.mxu0 %v66
    %102 = vmatprep.subr.mxu0 0.0
    %103 = vmatpush1.xpose.msra.mxu0 %v67
    %104 = vmatprep.subr.mxu0 0.0
    %105 = vmatpush1.xpose.msra.mxu0 %v68
    %106 = vmatprep.subr.mxu0 0.0
    %107 = vmatpush1.xpose.msra.mxu0 %v69
    %108 = vmatprep.subr.mxu0 0.0
    %109 = vmatpush1.xpose.msra.mxu0 %v70
    %110 = vmatprep.subr.mxu0 0.0
    %111 = vmatpush1.xpose.msra.mxu0 0.0
    %112 = vmatprep.subr.mxu0 0.0
    %113 = vmatpush1.xpose.msra.mxu0 0.0
    %114 = vmatprep.subr.mxu0 0.0
    %115 = vmatpush1.xpose.msra.mxu0 0.0
    %116 = vmatprep.subr.mxu0 0.0
    %117 = vmatpush1.xpose.msra.mxu0 0.0
    %118 = vmatprep.subr.mxu0 0.0
    %119 = vmatpush1.xpose.msra.mxu0 0.0
    %120 = vmatprep.subr.mxu0 0.0
    %121 = vmatpush1.xpose.msra.mxu0 0.0
    %122 = vmatprep.subr.mxu0 0.0
    %123 = vmatpush1.xpose.msra.mxu0 0.0
    %124 = vmatprep.subr.mxu0 0.0
    %125 = vmatpush1.xpose.msra.mxu0 0.0
    %126 = vmatprep.subr.mxu0 0.0
    %127 = vmatpush1.xpose.msra.mxu0 0.0
    %128 = vmatprep.subr.mxu0 0.0
    %129 = vmatpush1.xpose.msra.mxu0 0.0
    %130 = vmatprep.subr.mxu0 0.0
    %131 = vmatpush1.xpose.msra.mxu0 0.0
    %132 = vmatprep.subr.mxu0 0.0
    %133 = vmatpush1.xpose.msra.mxu0 0.0
    %134 = vmatprep.subr.mxu0 0.0
    %135 = vmatpush1.xpose.msra.mxu0 0.0
    %136 = vmatprep.subr.mxu0 0.0
    %137 = vmatpush1.xpose.msra.mxu0 0.0
    %138 = vmatprep.subr.mxu0 0.0
    %139 = vmatpush1.xpose.msra.mxu0 0.0
    %140 = vmatprep.subr.mxu0 0.0
    %141 = vmatpush1.xpose.msra.mxu0 0.0
    %142 = vmatprep.mubr.f32.mxu0 0.0
    %143 = vmatmul.mubr.f32.gmra.mrb[0].mxu0 %v54
    %v144 = vpop.f32.mrb[0].mxu0
    %v145 = vadd.f32 %v76, %v144
    %v146 = vpop.f32.mrb[0].mxu0
    %147 = vdwg.mxu0
    %148 = vst [vmem:[#allocation8] sm:$0xff] %v145
    // Predicated region
    $region26: #{tpu_custom_call.1} parent=1 // pred_check
      _
    $region27: #{tpu_custom_call.1} parent=1 // pred_check_branch
      %150 = sbr.rel (0) target = $region29
    $region28: #{tpu_custom_call.1} parent=1 // pred_region
      %s152 = ssub.s32 128, 128
      %153 = vsyncadd [#allocation5], %s152
      %s155 = sshll.u32 [#allocation8], 4
      %s156 = int_to_ptr.vmem [resolvable:$true] %s155
      %158 = dma.vmem_to_hbm [thread:$0]  %s156, 128, %s3, [#allocation5]
    $region29: #{tpu_custom_call.1} parent=1 // pred_fallthru
      _
    // Predicated region
    $region30: #{tpu_custom_call.1} parent=1 // pred_check
      _
    $region31: #{tpu_custom_call.1} parent=1 // pred_check_branch
      %160 = sbr.rel (0) target = $region33
    $region32: #{tpu_custom_call.1} parent=1 // pred_region
      %161 = dma.done [#allocation5], 128
    $region33: #{tpu_custom_call.1} parent=1 // pred_fallthru
      _
    %162 = vsyncpa [#allocation4], 1
    %163 = vsyncpa [#allocation7], 1
    %164 = vsyncpa [#allocation5], 1

</llo_original>
